<compile_context>
chip_gen: v7x
topology: tpu7x:2x2x1
jax: 0.10.0
libtpu: 0.0.40
codegen_flags: <defaults>
</compile_context>

<pallas_src>
import functools

import jax
import jax.numpy as jnp
from jax.experimental import pallas as pl
from jax.experimental.pallas import tpu as pltpu


def _round_up(x, m):
    return ((x + m - 1) // m) * m


def _choose_flash_tiles(n_pad):
    """Pick (tq, tk) for the flash kernel. n_pad is a multiple of 256.

    Large tiles amortize per-grid-step overhead and divide K/V HBM
    re-streaming by the number of q tiles; the q axis keeps >= 2 blocks so
    v7x's two TensorCores both get work; tk >= 256 keeps the p@v contraction
    filling the 256-deep v6e/v7x MXU.
    """
    tq = 256
    for cand in (1024, 512):
        if n_pad % cand == 0 and n_pad // cand >= 2:
            tq = cand
            break
    tk = 512 if n_pad % 512 == 0 else 256
    return tq, tk


def _choose_proj_tile(n_pad):
    for cand in (1024, 512, 256):
        if n_pad % cand == 0:
            return cand
    return n_pad


def fuse_weights(wq, wk, wv, temperature=8.0, compute_dtype=jnp.bfloat16):
    """Build the fused, lane-padded projection weight once (cacheable)."""
    dq, dk, dv = wq.shape[1], wk.shape[1], wv.shape[1]
    dq_p, dk_p, dv_p = (_round_up(v, 128) for v in (dq, dk, dv))
    parts = [
        jnp.pad(wq * (1.0 / temperature), ((0, 0), (0, dq_p - dq))),
        jnp.pad(wk, ((0, 0), (0, dk_p - dk))),
        jnp.pad(wv, ((0, 0), (0, dv_p - dv))),
    ]
    return jnp.concatenate(parts, axis=1).astype(compute_dtype)


# --------------------------------------------------------------------------
# Kernels
# --------------------------------------------------------------------------
def _proj_kernel(x_ref, w_hbm, q_ref, k_ref, v_ref, w_vmem, sem, *, dq_p, dk_p):
    """qkv = x @ [Wq/8 | Wk | Wv] with a single VMEM copy of the weight."""
    # Copy the (constant) fused weight HBM -> VMEM scratch exactly once.
    # Row axis is "arbitrary" so grid index 0 is guaranteed to run first on
    # the single executing core.
    @pl.when(pl.program_id(0) == 0)
    def _():
        cp = pltpu.make_async_copy(w_hbm, w_vmem, sem)
        cp.start()
        cp.wait()

    qkv = jnp.dot(x_ref[...], w_vmem[...], preferred_element_type=jnp.float32)
    q_ref[...] = qkv[:, :dq_p].astype(q_ref.dtype)
    k_ref[...] = qkv[:, dq_p:dq_p + dk_p].astype(k_ref.dtype)
    v_ref[...] = qkv[:, dq_p + dk_p:].astype(v_ref.dtype)


def _flash_kernel(*refs, n_rem, has_mask, needs_pad_mask):
    if has_mask:
        q_ref, k_ref, v_ref, mask_ref, o_ref, m_sc, l_sc = refs
    else:
        q_ref, k_ref, v_ref, o_ref, m_sc, l_sc = refs
        mask_ref = None

    ki = pl.program_id(1)
    nk = pl.num_programs(1)

    @pl.when(ki == 0)
    def _():
        m_sc[...] = jnp.full_like(m_sc, -jnp.inf)
        l_sc[...] = jnp.zeros_like(l_sc)
        o_ref[...] = jnp.zeros_like(o_ref)   # o_ref is the resident accumulator

    # (tq, d) x (tk, d) contracted on d: NT matmul, no explicit K transpose.
    s = jax.lax.dot_general(
        q_ref[...], k_ref[...],
        dimension_numbers=(((1,), (1,)), ((), ())),
        preferred_element_type=jnp.float32)               # (tq, tk) f32

    if has_mask:
        # PyTorch: attn.masked_fill_(mask == 0, -1e9).  Zero padding in the
        # padded mask also masks the padded key columns.
        s = jnp.where(mask_ref[...] == 0, jnp.float32(-1e9), s)

    def update(s_val):
        # Online (flash) softmax; m/l scratch is lane-dense (tq, 128).
        m_prev = m_sc[...]                                    # (tq, 128)
        m_cur = jnp.max(s_val, axis=-1, keepdims=True)        # (tq, 1)
        m_new = jnp.maximum(m_prev, m_cur)                    # (tq, 128)
        alpha = jnp.exp(m_prev - m_new)                       # (tq, 128)
        p = jnp.exp(s_val - m_new[:, :1])                     # (tq, tk)
        l_sc[...] = alpha * l_sc[...] + jnp.sum(p, axis=-1, keepdims=True)
        o_ref[...] = alpha[:, :1] * o_ref[...] + jnp.dot(
            p.astype(v_ref.dtype), v_ref[...],
            preferred_element_type=jnp.float32)
        m_sc[...] = m_new

    if needs_pad_mask:
        # Only the LAST key tile contains zero-padded key rows; gate the
        # iota/compare/select so every other step pays nothing.
        @pl.when(ki < nk - 1)
        def _():
            update(s)

        @pl.when(ki == nk - 1)
        def _():
            col = jax.lax.broadcasted_iota(jnp.int32, s.shape, 1)
            update(jnp.where(col < n_rem, s, jnp.float32(-1e9)))
    else:
        update(s)

    @pl.when(ki == nk - 1)
    def _():
        # Exact reciprocal: only tq values, approx buys nothing here.
        inv_l = pl.reciprocal(l_sc[...][:, :1], approx=False)
        o_ref[...] = o_ref[...] * inv_l


def _fused_attn_kernel(*refs, dq_p, dk_p, n_valid, has_mask, compute_dtype):
    """Single-tile (small N) path: projection + attention in one kernel,
    so q/k/v never round-trip through HBM."""
    if has_mask:
        x_ref, w_ref, mask_ref, o_ref = refs
    else:
        x_ref, w_ref, o_ref = refs
        mask_ref = None

    qkv = jnp.dot(x_ref[...], w_ref[...], preferred_element_type=jnp.float32)
    q = qkv[:, :dq_p].astype(compute_dtype)
    k = qkv[:, dq_p:dq_p + dk_p].astype(compute_dtype)
    v = qkv[:, dq_p + dk_p:].astype(compute_dtype)

    s = jax.lax.dot_general(
        q, k, dimension_numbers=(((1,), (1,)), ((), ())),
        preferred_element_type=jnp.float32)               # (n_pad, n_pad)

    if has_mask:
        s = jnp.where(mask_ref[...] == 0, jnp.float32(-1e9), s)
    elif n_valid < s.shape[1]:
        col = jax.lax.broadcasted_iota(jnp.int32, s.shape, 1)
        s = jnp.where(col < n_valid, s, jnp.float32(-1e9))

    m = jnp.max(s, axis=-1, keepdims=True)
    p = jnp.exp(s - m)
    l = jnp.sum(p, axis=-1, keepdims=True)
    out = jnp.dot(p.astype(compute_dtype), v, preferred_element_type=jnp.float32)
    o_ref[...] = out * pl.reciprocal(l, approx=False)


# --------------------------------------------------------------------------
# Wrapper
# --------------------------------------------------------------------------
def atten_module_forward(x, wq, wk, wv, mask=None, *, w_fused=None,
                         compute_dtype=jnp.bfloat16):
    """Pallas forward pass equivalent to atten_module.forward (eval mode)."""
    n, d = x.shape
    dq, dk, dv = wq.shape[1], wk.shape[1], wv.shape[1]
    assert dq == dk, "query_dim must equal key_dim (required by q @ k.T)"

    dq_p = _round_up(dq, 128)
    dk_p = _round_up(dk, 128)
    dv_p = _round_up(dv, 128)

    if w_fused is None:
        # In eval mode this is constant; callers can precompute it with
        # fuse_weights() and pass it in to avoid per-call XLA work.
        w_fused = fuse_weights(wq, wk, wv, temperature=8.0,
                               compute_dtype=compute_dtype)

    has_mask = mask is not None

    # ---------------- small-N fully fused path ------------------------------
    if n <= 256:
        n_pad = _round_up(n, 8)
        x_pad = jnp.pad(x, ((0, n_pad - n), (0, 0))).astype(compute_dtype)
        args = [x_pad, w_fused]
        if has_mask:
            mask_i8 = (mask != 0).astype(jnp.int8)
            args.append(jnp.pad(mask_i8, ((0, n_pad - n), (0, n_pad - n))))
        out = pl.pallas_call(
            functools.partial(_fused_attn_kernel, dq_p=dq_p, dk_p=dk_p,
                              n_valid=n, has_mask=has_mask,
                              compute_dtype=compute_dtype),
            out_shape=jax.ShapeDtypeStruct((n_pad, dv_p), jnp.float32),
        )(*args)
        return out[:n, :dv]

    # ---------------- large-N path: projection kernel + flash kernel --------
    n_pad = _round_up(n, 256)
    x_pad = jnp.pad(x, ((0, n_pad - n), (0, 0))).astype(compute_dtype)
    w_tot = dq_p + dk_p + dv_p

    tm = _choose_proj_tile(n_pad)
    q, k, v = pl.pallas_call(
        functools.partial(_proj_kernel, dq_p=dq_p, dk_p=dk_p),
        out_shape=(jax.ShapeDtypeStruct((n_pad, dq_p), compute_dtype),
                   jax.ShapeDtypeStruct((n_pad, dk_p), compute_dtype),
                   jax.ShapeDtypeStruct((n_pad, dv_p), compute_dtype)),
        grid_spec=pltpu.PrefetchScalarGridSpec(
            num_scalar_prefetch=0,
            grid=(n_pad // tm,),
            in_specs=[
                pl.BlockSpec((tm, d), lambda i: (i, 0)),
                pl.BlockSpec(memory_space=pl.ANY),   # weight stays in HBM
            ],
            out_specs=[
                pl.BlockSpec((tm, dq_p), lambda i: (i, 0)),
                pl.BlockSpec((tm, dk_p), lambda i: (i, 0)),
                pl.BlockSpec((tm, dv_p), lambda i: (i, 0)),
            ],
            scratch_shapes=[
                pltpu.VMEM((d, w_tot), compute_dtype),   # single weight copy
                pltpu.SemaphoreType.DMA,
            ],
        ),
        compiler_params=pltpu.CompilerParams(
            dimension_semantics=("arbitrary",)),
    )(x_pad, w_fused)

    tq, tk = _choose_flash_tiles(n_pad)
    needs_pad_mask = (not has_mask) and (n_pad > n)
    # Padding (< 256 rows) is always confined to the last key tile (tk >= 256).
    n_rem = n - (n_pad // tk - 1) * tk

    in_specs = [
        pl.BlockSpec((tq, dq_p), lambda qi, ki: (qi, 0)),
        pl.BlockSpec((tk, dk_p), lambda qi, ki: (ki, 0)),
        pl.BlockSpec((tk, dv_p), lambda qi, ki: (ki, 0)),
    ]
    args = [q, k, v]
    if has_mask:
        # int8 mask: 4x less HBM/VMEM than int32; zero padding masks the
        # padded key columns (and padded query rows, which are discarded).
        mask_i8 = (mask != 0).astype(jnp.int8)
        mask_pad = jnp.pad(mask_i8, ((0, n_pad - n), (0, n_pad - n)))
        in_specs.append(pl.BlockSpec((tq, tk), lambda qi, ki: (qi, ki)))
        args.append(mask_pad)

    n_q_tiles = n_pad // tq
    cost = pl.CostEstimate(
        flops=int(2 * n_pad * n_pad * (dq_p + dv_p)),
        transcendentals=int(n_pad * n_pad),
        bytes_accessed=int(n_pad * dq_p * 2                       # q once
                           + n_q_tiles * n_pad * (dk_p + dv_p) * 2  # k/v re-streamed
                           + (n_pad * n_pad if has_mask else 0)     # int8 mask
                           + n_pad * dv_p * 4))                     # f32 output

    out = pl.pallas_call(
        functools.partial(_flash_kernel, n_rem=n_rem,
                          has_mask=has_mask, needs_pad_mask=needs_pad_mask),
        out_shape=jax.ShapeDtypeStruct((n_pad, dv_p), jnp.float32),
        grid_spec=pltpu.PrefetchScalarGridSpec(
            num_scalar_prefetch=0,
            grid=(n_pad // tq, n_pad // tk),
            in_specs=in_specs,
            out_specs=pl.BlockSpec((tq, dv_p), lambda qi, ki: (qi, 0)),
            scratch_shapes=[
                pltpu.VMEM((tq, 128), jnp.float32),   # running max  m (lane-dense)
                pltpu.VMEM((tq, 128), jnp.float32),   # running sum  l (lane-dense)
            ],
        ),
        compiler_params=pltpu.CompilerParams(
            dimension_semantics=("parallel", "arbitrary")),
        cost_estimate=cost,
    )(*args)

    return out[:n, :dv]


# --------------------------------------------------------------------------
# Parameter init + pure-JAX reference (for self-checking)
# --------------------------------------------------------------------------
def init_params(key, input_dim, value_dim=None, query_dim=None, key_dim=None):
    """Re-implementation of reset_parameters(): U(-1/sqrt(D), 1/sqrt(D))."""
    if value_dim is None:
        value_dim = input_dim
    if query_dim is None:
        query_dim = value_dim
    if key_dim is None:
        key_dim = value_dim
    bound = 1.0 / (input_dim ** 0.5)
    kv, kq, kk = jax.random.split(key, 3)
    wv = jax.random.uniform(kv, (input_dim, value_dim), jnp.float32, -bound, bound)
    wq = jax.random.uniform(kq, (input_dim, query_dim), jnp.float32, -bound, bound)
    wk = jax.random.uniform(kk, (input_dim, key_dim), jnp.float32, -bound, bound)
    return wq, wk, wv


def reference_forward(x, wq, wk, wv, mask=None):
    q = x @ wq
    k = x @ wk
    v = x @ wv
    attn = (q / 8.0) @ k.T
    if mask is not None:
        attn = jnp.where(mask == 0, -1e9, attn)
    attn = jax.nn.softmax(attn, axis=-1)
    return attn @ v


if __name__ == "__main__":
    key = jax.random.PRNGKey(0)
    k_x, k_p, k_m, k_x2, k_m2 = jax.random.split(key, 5)

    # Small shapes consistent with the module: N tokens x input_dim features.
    seq = 8
    input_dim = 32

    x = jax.random.normal(k_x, (seq, input_dim), jnp.float32)
    wq, wk, wv = init_params(k_p, input_dim)

    # --- small-N fused path, mask=None -------------------------------------
    out = jax.block_until_ready(atten_module_forward(x, wq, wk, wv))
    ref = reference_forward(x, wq, wk, wv)
    assert out.shape == (seq, input_dim), out.shape
    # bf16 MXU operands -> loosened tolerance vs f32 reference.
    assert jnp.allclose(out, ref, atol=3e-2, rtol=3e-2), "mismatch (small, no mask)"

    # --- small-N fused path, with mask --------------------------------------
    mask = (jax.random.uniform(k_m, (seq, seq)) > 0.3).astype(jnp.int32)
    mask = mask.at[:, 0].set(1)   # keep every row at least partially unmasked
    out_m = jax.block_until_ready(atten_module_forward(x, wq, wk, wv, mask))
    ref_m = reference_forward(x, wq, wk, wv, mask)
    assert jnp.allclose(out_m, ref_m, atol=3e-2, rtol=3e-2), "mismatch (small, mask)"

    # --- medium N: exercises projection + flash kernels (multiple k tiles,
    #     gated padding mask, resident-output accumulation) -------------------
    seq2 = 520
    x2 = jax.random.normal(k_x2, (seq2, input_dim), jnp.float32)
    out2 = jax.block_until_ready(atten_module_forward(x2, wq, wk, wv))
    ref2 = reference_forward(x2, wq, wk, wv)
    assert out2.shape == (seq2, input_dim), out2.shape
    assert jnp.allclose(out2, ref2, atol=3e-2, rtol=3e-2), "mismatch (flash, no mask)"

    mask2 = (jax.random.uniform(k_m2, (seq2, seq2)) > 0.3).astype(jnp.int32)
    mask2 = mask2.at[:, 0].set(1)
    out2_m = jax.block_until_ready(atten_module_forward(x2, wq, wk, wv, mask2))
    ref2_m = reference_forward(x2, wq, wk, wv, mask2)
    assert jnp.allclose(out2_m, ref2_m, atol=3e-2, rtol=3e-2), "mismatch (flash, mask)"

    print("KERNEL_OK")
</pallas_src>

<mosaic_0001>
module attributes {stable_mosaic.version = 11 : i64} {
  func.func @_fused_attn_kernel(%arg0: memref<8x32xbf16, #tpu.memory_space<vmem>>, %arg1: memref<32x384xbf16, #tpu.memory_space<vmem>>, %arg2: memref<8x128xf32, #tpu.memory_space<vmem>>) attributes {dimension_semantics = [], scalar_prefetch = 0 : i64, scratch_operands = 0 : i64, tpu.core_type = #tpu.core_type<tc>} {
    %c0 = arith.constant 0 : index
    %c0_0 = arith.constant 0 : index
    %0 = vector.load %arg0[%c0, %c0_0] : memref<8x32xbf16, #tpu.memory_space<vmem>>, vector<8x32xbf16>
    %c0_1 = arith.constant 0 : index
    %c0_2 = arith.constant 0 : index
    %1 = vector.load %arg1[%c0_1, %c0_2] : memref<32x384xbf16, #tpu.memory_space<vmem>>, vector<32x384xbf16>
    %cst = arith.constant dense<0.000000e+00> : vector<8x384xf32>
    %2 = tpu.matmul %0, %1, %cst {dimension_numbers = #tpu.dot_dimension_numbers<[1], [0], [0], [1], [0, 0, 1, 1], [], []>} : vector<8x32xbf16>, vector<32x384xbf16>, vector<8x384xf32> -> vector<8x384xf32>
    %3 = vector.extract_strided_slice %2 {offsets = [0, 0], sizes = [8, 128], strides = [1, 1]} : vector<8x384xf32> to vector<8x128xf32>
    %4 = arith.truncf %3 : vector<8x128xf32> to vector<8x128xbf16>
    %5 = vector.extract_strided_slice %2 {offsets = [0, 128], sizes = [8, 128], strides = [1, 1]} : vector<8x384xf32> to vector<8x128xf32>
    %6 = arith.truncf %5 : vector<8x128xf32> to vector<8x128xbf16>
    %7 = vector.extract_strided_slice %2 {offsets = [0, 256], sizes = [8, 128], strides = [1, 1]} : vector<8x384xf32> to vector<8x128xf32>
    %8 = arith.truncf %7 : vector<8x128xf32> to vector<8x128xbf16>
    %cst_3 = arith.constant dense<0.000000e+00> : vector<8x8xf32>
    %9 = tpu.matmul %4, %6, %cst_3 {dimension_numbers = #tpu.dot_dimension_numbers<[1], [1], [0], [0], [0, 0, 1, 0], [], []>} : vector<8x128xbf16>, vector<8x128xbf16>, vector<8x8xf32> -> vector<8x8xf32>
    %cst_4 = arith.constant dense<0xFF800000> : vector<8xf32>
    %10 = vector.multi_reduction <maximumf>, %9, %cst_4 [1] : vector<8x8xf32> to vector<8xf32>
    %11 = vector.shape_cast %10 : vector<8xf32> to vector<8x1xf32>
    %12 = vector.broadcast %11 : vector<8x1xf32> to vector<8x8xf32>
    %13 = arith.subf %9, %12 : vector<8x8xf32>
    %14 = math.exp %13 : vector<8x8xf32>
    %cst_5 = arith.constant dense<0.000000e+00> : vector<8xf32>
    %15 = vector.multi_reduction <add>, %14, %cst_5 [1] : vector<8x8xf32> to vector<8xf32>
    %16 = vector.shape_cast %15 : vector<8xf32> to vector<8x1xf32>
    %17 = arith.truncf %14 : vector<8x8xf32> to vector<8x8xbf16>
    %cst_6 = arith.constant dense<0.000000e+00> : vector<8x128xf32>
    %18 = tpu.matmul %17, %8, %cst_6 {dimension_numbers = #tpu.dot_dimension_numbers<[1], [0], [0], [1], [0, 0, 1, 1], [], []>} : vector<8x8xbf16>, vector<8x128xbf16>, vector<8x128xf32> -> vector<8x128xf32>
    %19 = tpu.reciprocal %16 : vector<8x1xf32> -> vector<8x1xf32>
    %20 = vector.broadcast %19 : vector<8x1xf32> to vector<8x128xf32>
    %21 = arith.mulf %18, %20 : vector<8x128xf32>
    %c0_7 = arith.constant 0 : index
    %c0_8 = arith.constant 0 : index
    %22 = vector.load %arg2[%c0_7, %c0_8] : memref<8x128xf32, #tpu.memory_space<vmem>>, vector<8x128xf32>
    tpu.vector_store %arg2[%c0_7, %c0_8], %21 {strides = array<i32>} : memref<8x128xf32, #tpu.memory_space<vmem>>, vector<8x128xf32>,
    return
  }
}

</mosaic_0001>

<llo_original>
// kernel: tpu_custom_call.1
$region0: #{tpu_custom_call.1}
  #allocation0 [shape = 'u32[]', space=smem, size = 0x4, offset = 0x4, fixed_abs, tag = 'smem constant byte address 0x4 - core index']
  #allocation1 [shape = 'u32[144,128]{1,0:T(1,128)}', space=vmem, size = 0x12000, scoped, tag = 'internal scratch']
  %s0 = inlined_call_operand.hbm [shape: bf16[8,32], index: 0, kind: input, shape index: {}]
  %s1 = inlined_call_operand.hbm [shape: bf16[32,384], index: 1, kind: input, shape index: {}]
  %s2 = inlined_call_operand.hbm [shape: f32[8,128], index: 2, kind: output, shape index: {}]
  %s3 = sld [smem:[#allocation0]]
  $region26: #{tpu_custom_call.1} parent=0
    _
  %s5 = ssub.s32 1, %s3
  %s6 = scalar_select 0, %s5, %s3
  $region1: #{tpu_custom_call.1} parent=0
    #allocation2 [shape = 'u8[2048]{0}', space=vmem, size = 0x800, scoped, tag = 'input window, operand 0, single buffered']
    #allocation3 [shape = 's32[1]{0}', space=sflag, size = 0x4, scoped, tag = 'scoped memory for tpu_custom_call.1']
    #allocation4 [shape = 's32[1]{0}', space=sflag, size = 0x4, scoped, tag = 'scoped memory for tpu_custom_call.1']
    #allocation5 [shape = 'u8[24576]{0}', space=vmem, size = 0x6000, scoped, tag = 'input window, operand 1, single buffered']
    #allocation6 [shape = 's32[1]{0}', space=sflag, size = 0x4, scoped, tag = 'scoped memory for tpu_custom_call.1']
    #allocation7 [shape = 'u8[4096]{0}', space=vmem, size = 0x1000, scoped, tag = 'output window, operand 0, single buffered']
    %7 = vsyncpa [#allocation3], 0
    %8 = vsyncpa [#allocation6], 0
    %9 = vsyncpa [#allocation4], 0
    // Predicated region
    $region2: #{tpu_custom_call.1} parent=1 // pred_check
      _
    $region3: #{tpu_custom_call.1} parent=1 // pred_check_branch
      %11 = sbr.rel (0) target = $region5
    $region4: #{tpu_custom_call.1} parent=1 // pred_region
      %s13 = ssub.s32 64, 64
      %14 = vsyncadd [#allocation3], %s13
      %s16 = sshll.u32 [#allocation2], 4
      %s17 = int_to_ptr.vmem [resolvable:$true] %s16
      %19 = dma.hbm_to_vmem [thread:$0]  %s0, 64, %s17, [#allocation3]
    $region5: #{tpu_custom_call.1} parent=1 // pred_fallthru
      _
    // Predicated region
    $region6: #{tpu_custom_call.1} parent=1 // pred_check
      _
    $region7: #{tpu_custom_call.1} parent=1 // pred_check_branch
      %21 = sbr.rel (0) target = $region9
    $region8: #{tpu_custom_call.1} parent=1 // pred_region
      %s23 = ssub.s32 768, 768
      %24 = vsyncadd [#allocation6], %s23
      %s25 = sshll.u32 [#allocation5], 4
      %s26 = int_to_ptr.vmem [resolvable:$true] %s25
      %31 = dma.hbm_to_vmem [thread:$0]  %s1, 768, %s26, [#allocation6], 192, 192, 12
    $region9: #{tpu_custom_call.1} parent=1 // pred_fallthru
      _
    // Predicated region
    $region10: #{tpu_custom_call.1} parent=1 // pred_check
      _
    $region11: #{tpu_custom_call.1} parent=1 // pred_check_branch
      %33 = sbr.rel (0) target = $region13
    $region12: #{tpu_custom_call.1} parent=1 // pred_region
      %34 = dma.done [#allocation3], 64
    $region13: #{tpu_custom_call.1} parent=1 // pred_fallthru
      _
    // Predicated region
    $region14: #{tpu_custom_call.1} parent=1 // pred_check
      _
    $region15: #{tpu_custom_call.1} parent=1 // pred_check_branch
      %36 = sbr.rel (0) target = $region17
    $region16: #{tpu_custom_call.1} parent=1 // pred_region
      %37 = dma.done [#allocation6], 768
    $region17: #{tpu_custom_call.1} parent=1 // pred_fallthru
      _
    %v39 = vld [vmem:[#allocation2] sm:$0xf]
    %v40 = vld [vmem:[#allocation5] sm:$0xff]
    %v41 = vld [vmem:[#allocation5 + $0x8] sm:$0xf]
    %v42 = vld [vmem:[#allocation5 + $0xc] sm:$0xff]
    %v43 = vld [vmem:[#allocation5 + $0x14] sm:$0xf]
    %v44 = vld [vmem:[#allocation5 + $0x18] sm:$0xff]
    %v45 = vld [vmem:[#allocation5 + $0x20] sm:$0xf]
    %v46 = vld [vmem:[#allocation5 + $0x24] sm:$0xff]
    %v47 = vld [vmem:[#allocation5 + $0x2c] sm:$0xf]
    %v56 = vunpack.c.l.b16 %v40
    %v57 = vunpack.c.h.b16 %v40
    %v58 = vunpack.c.l.b16 %v41
    %v59 = vunpack.c.l.b16 %v42
    %v60 = vunpack.c.h.b16 %v42
    %v61 = vunpack.c.l.b16 %v43
    %v62 = vunpack.c.l.b16 %v44
    %v63 = vunpack.c.h.b16 %v44
    %v64 = vunpack.c.l.b16 %v45
    %v65 = vunpack.c.l.b16 %v46
    %v66 = vunpack.c.h.b16 %v46
    %v67 = vunpack.c.l.b16 %v47
    %v68 = vpack.c.b16 %v59, %v56
    %v69 = vpack.c.b16 %v60, %v57
    %v70 = vpack.c.b16 %v61, %v58
    %v71 = vpack.c.b16 %v65, %v62
    %v72 = vpack.c.b16 %v66, %v63
    %v73 = vpack.c.b16 %v67, %v64
    %vm80 = vcmask 261120
    %v82 = vsel %vm80, %v39, 0
    %84 = vmatprep.subr.bf16.mxu0 %v69
    %85 = vmatpush1.bf16.msra.mxu0 %v68
    %86 = vmatprep.subr.bf16.mxu0 %v72
    %87 = vmatpush1.bf16.msra.mxu0 %v71
    %88 = vmatprep.subr.bf16.mxu0 0
    %89 = vmatpush1.bf16.msra.mxu0 0
    %90 = vmatprep.subr.bf16.mxu0 0
    %91 = vmatpush1.bf16.msra.mxu0 0
    %92 = vmatprep.subr.bf16.mxu0 0
    %93 = vmatpush1.bf16.msra.mxu0 0
    %94 = vmatprep.subr.bf16.mxu0 0
    %95 = vmatpush1.bf16.msra.mxu0 0
    %96 = vmatprep.subr.bf16.mxu0 0
    %97 = vmatpush1.bf16.msra.mxu0 0
    %98 = vmatprep.subr.bf16.mxu0 0
    %99 = vmatpush1.bf16.msra.mxu0 0
    %100 = vmatprep.subr.bf16.mxu0 0
    %101 = vmatpush1.bf16.msra.mxu0 0
    %102 = vmatprep.subr.bf16.mxu0 0
    %103 = vmatpush1.bf16.msra.mxu0 0
    %104 = vmatprep.subr.bf16.mxu0 0
    %105 = vmatpush1.bf16.msra.mxu0 0
    %106 = vmatprep.subr.bf16.mxu0 0
    %107 = vmatpush1.bf16.msra.mxu0 0
    %108 = vmatprep.subr.bf16.mxu0 0
    %109 = vmatpush1.bf16.msra.mxu0 0
    %110 = vmatprep.subr.bf16.mxu0 0
    %111 = vmatpush1.bf16.msra.mxu0 0
    %112 = vmatprep.subr.bf16.mxu0 0
    %113 = vmatpush1.bf16.msra.mxu0 0
    %114 = vmatprep.subr.bf16.mxu0 0
    %115 = vmatpush1.bf16.msra.mxu0 0
    %116 = vmatprep.mubr.bf16.mxu0 0
    %117 = vmatmul.mubr.bf16.gmra.mrb[0].mxu0 %v82
    %v118 = vpop.f32.mrb[0].mxu0
    %v119 = vadd.f32 0.0, %v118
    %v120 = vpop.f32.mrb[0].mxu0
    %v121 = vadd.f32 0.0, %v120
    %v122 = vpop.f32.mrb[0].mxu0
    %v123 = vpop.f32.mrb[0].mxu0
    %124 = vdwg.mxu0
    %125 = vmatprep.subr.bf16.mxu0 0
    %126 = vmatpush1.bf16.msra.mxu0 %v70
    %127 = vmatprep.subr.bf16.mxu0 0
    %128 = vmatpush1.bf16.msra.mxu0 %v73
    %129 = vmatprep.subr.bf16.mxu0 0
    %130 = vmatpush1.bf16.msra.mxu0 0
    %131 = vmatprep.subr.bf16.mxu0 0
    %132 = vmatpush1.bf16.msra.mxu0 0
    %133 = vmatprep.subr.bf16.mxu0 0
    %134 = vmatpush1.bf16.msra.mxu0 0
    %135 = vmatprep.subr.bf16.mxu0 0
    %136 = vmatpush1.bf16.msra.mxu0 0
    %137 = vmatprep.subr.bf16.mxu0 0
    %138 = vmatpush1.bf16.msra.mxu0 0
    %139 = vmatprep.subr.bf16.mxu0 0
    %140 = vmatpush1.bf16.msra.mxu0 0
    %141 = vmatprep.subr.bf16.mxu0 0
    %142 = vmatpush1.bf16.msra.mxu0 0
    %143 = vmatprep.subr.bf16.mxu0 0
    %144 = vmatpush1.bf16.msra.mxu0 0
    %145 = vmatprep.subr.bf16.mxu0 0
    %146 = vmatpush1.bf16.msra.mxu0 0
    %147 = vmatprep.subr.bf16.mxu0 0
    %148 = vmatpush1.bf16.msra.mxu0 0
    %149 = vmatprep.subr.bf16.mxu0 0
    %150 = vmatpush1.bf16.msra.mxu0 0
    %151 = vmatprep.subr.bf16.mxu0 0
    %152 = vmatpush1.bf16.msra.mxu0 0
    %153 = vmatprep.subr.bf16.mxu0 0
    %154 = vmatpush1.bf16.msra.mxu0 0
    %155 = vmatprep.subr.bf16.mxu0 0
    %156 = vmatpush1.bf16.msra.mxu0 0
    %157 = vmatprep.mubr.bf16.mxu0 0
    %158 = vmatmul.mubr.bf16.gmra.mrb[0].mxu0 %v82
    %v159 = vpop.f32.mrb[0].mxu0
    %v160 = vadd.f32 0.0, %v159
    %v161 = vpop.f32.mrb[0].mxu0
    %v162 = vpop.f32.mrb[0].mxu0
    %v163 = vpop.f32.mrb[0].mxu0
    %164 = vdwg.mxu0
    %v165 = vpack.c.bf16 %v119, %v119
    %v166 = vpack.c.bf16 %v121, %v121
    %v167 = vpack.c.bf16 %v160, %v160
    %168 = vmatprep.subr.bf16.mxu0 0
    %169 = vmatpush1.bf16.xpose.msra.mxu0 %v166
    %170 = vmatprep.subr.bf16.mxu0 0
    %171 = vmatpush1.bf16.xpose.msra.mxu0 0
    %172 = vmatprep.subr.bf16.mxu0 0
    %173 = vmatpush1.bf16.xpose.msra.mxu0 0
    %174 = vmatprep.subr.bf16.mxu0 0
    %175 = vmatpush1.bf16.xpose.msra.mxu0 0
    %176 = vmatprep.subr.bf16.mxu0 0
    %177 = vmatpush1.bf16.xpose.msra.mxu0 0
    %178 = vmatprep.subr.bf16.mxu0 0
    %179 = vmatpush1.bf16.xpose.msra.mxu0 0
    %180 = vmatprep.subr.bf16.mxu0 0
    %181 = vmatpush1.bf16.xpose.msra.mxu0 0
    %182 = vmatprep.subr.bf16.mxu0 0
    %183 = vmatpush1.bf16.xpose.msra.mxu0 0
    %184 = vmatprep.subr.bf16.mxu0 0
    %185 = vmatpush1.bf16.xpose.msra.mxu0 0
    %186 = vmatprep.subr.bf16.mxu0 0
    %187 = vmatpush1.bf16.xpose.msra.mxu0 0
    %188 = vmatprep.subr.bf16.mxu0 0
    %189 = vmatpush1.bf16.xpose.msra.mxu0 0
    %190 = vmatprep.subr.bf16.mxu0 0
    %191 = vmatpush1.bf16.xpose.msra.mxu0 0
    %192 = vmatprep.subr.bf16.mxu0 0
    %193 = vmatpush1.bf16.xpose.msra.mxu0 0
    %194 = vmatprep.subr.bf16.mxu0 0
    %195 = vmatpush1.bf16.xpose.msra.mxu0 0
    %196 = vmatprep.subr.bf16.mxu0 0
    %197 = vmatpush1.bf16.xpose.msra.mxu0 0
    %198 = vmatprep.subr.bf16.mxu0 0
    %199 = vmatpush1.bf16.xpose.msra.mxu0 0
    %200 = vmatprep.mubr.bf16.mxu0 0
    %201 = vmatmul.mubr.bf16.gmra.mrb[0].mxu0 %v165
    %v202 = vpop.f32.mrb[0].mxu0
    %v203 = vadd.f32 0.0, %v202
    %v204 = vpop.f32.mrb[0].mxu0
    %v205 = vpop.f32.mrb[0].mxu0
    %v206 = vpop.f32.mrb[0].mxu0
    %207 = vdwg.mxu0
    %vm208 = vcmask 64512
    %v209 = vsel %vm208, %v203, -inf
    %210 = vmax.xlane.f32.xlu0 %v209
    %v211 = vpop.xlane.xlu0 %210
    %v212 = vsub.f32 %v203, %v211
    %v213 = vmul.f32 %v212, 1.442695
    %v214 = vpow.pop %v213
    %v215 = vsel %vm208, %v214, 0.0
    %216 = vadd.xlane.f32.xlu0 %v215
    %v217 = vpop.xlane.xlu0 %216
    %v218 = vpack.c.bf16 %v214, %v214
    %v220 = vsel %vm208, %v218, 0
    %vm222 = vcmask 1043456
    %v224 = vsel %vm222, %v167, 0
    %226 = vmatprep.subr.bf16.mxu0 0
    %227 = vmatpush1.bf16.msra.mxu0 %v224
    %228 = vmatprep.subr.bf16.mxu0 0
    %229 = vmatpush1.bf16.msra.mxu0 0
    %230 = vmatprep.subr.bf16.mxu0 0
    %231 = vmatpush1.bf16.msra.mxu0 0
    %232 = vmatprep.subr.bf16.mxu0 0
    %233 = vmatpush1.bf16.msra.mxu0 0
    %234 = vmatprep.subr.bf16.mxu0 0
    %235 = vmatpush1.bf16.msra.mxu0 0
    %236 = vmatprep.subr.bf16.mxu0 0
    %237 = vmatpush1.bf16.msra.mxu0 0
    %238 = vmatprep.subr.bf16.mxu0 0
    %239 = vmatpush1.bf16.msra.mxu0 0
    %240 = vmatprep.subr.bf16.mxu0 0
    %241 = vmatpush1.bf16.msra.mxu0 0
    %242 = vmatprep.subr.bf16.mxu0 0
    %243 = vmatpush1.bf16.msra.mxu0 0
    %244 = vmatprep.subr.bf16.mxu0 0
    %245 = vmatpush1.bf16.msra.mxu0 0
    %246 = vmatprep.subr.bf16.mxu0 0
    %247 = vmatpush1.bf16.msra.mxu0 0
    %248 = vmatprep.subr.bf16.mxu0 0
    %249 = vmatpush1.bf16.msra.mxu0 0
    %250 = vmatprep.subr.bf16.mxu0 0
    %251 = vmatpush1.bf16.msra.mxu0 0
    %252 = vmatprep.subr.bf16.mxu0 0
    %253 = vmatpush1.bf16.msra.mxu0 0
    %254 = vmatprep.subr.bf16.mxu0 0
    %255 = vmatpush1.bf16.msra.mxu0 0
    %256 = vmatprep.subr.bf16.mxu0 0
    %257 = vmatpush1.bf16.msra.mxu0 0
    %258 = vmatprep.mubr.bf16.mxu0 0
    %259 = vmatmul.mubr.bf16.gmra.mrb[0].mxu0 %v220
    %v260 = vpop.f32.mrb[0].mxu0
    %v261 = vadd.f32 0.0, %v260
    %v262 = vpop.f32.mrb[0].mxu0
    %v263 = vpop.f32.mrb[0].mxu0
    %v264 = vpop.f32.mrb[0].mxu0
    %265 = vdwg.mxu0
    %v266 = vrcp.pop %v217
    %v267 = vmul.f32 %v261, %v266
    %268 = vst [vmem:[#allocation7] sm:$0xff] %v267
    // Predicated region
    $region18: #{tpu_custom_call.1} parent=1 // pred_check
      _
    $region19: #{tpu_custom_call.1} parent=1 // pred_check_branch
      %270 = sbr.rel (0) target = $region21
    $region20: #{tpu_custom_call.1} parent=1 // pred_region
      %s272 = ssub.s32 128, 128
      %273 = vsyncadd [#allocation4], %s272
      %s275 = sshll.u32 [#allocation7], 4
      %s276 = int_to_ptr.vmem [resolvable:$true] %s275
      %278 = dma.vmem_to_hbm [thread:$0]  %s276, 128, %s2, [#allocation4]
    $region21: #{tpu_custom_call.1} parent=1 // pred_fallthru
      _
    // Predicated region
    $region22: #{tpu_custom_call.1} parent=1 // pred_check
      _
    $region23: #{tpu_custom_call.1} parent=1 // pred_check_branch
      %280 = sbr.rel (0) target = $region25
    $region24: #{tpu_custom_call.1} parent=1 // pred_region
      %281 = dma.done [#allocation4], 128
    $region25: #{tpu_custom_call.1} parent=1 // pred_fallthru
      _
    %282 = vsyncpa [#allocation3], 1
    %283 = vsyncpa [#allocation6], 1
    %284 = vsyncpa [#allocation4], 1

</llo_original>
